<compile_context>
chip_gen: v7x
topology: tpu7x:2x2x1
jax: 0.10.0
libtpu: 0.0.40
codegen_flags: <defaults>
</compile_context>

<pallas_src>
import functools

import jax
import jax.numpy as jnp
from jax import lax
from jax.experimental import pallas as pl
from jax.experimental.pallas import tpu as pltpu
import numpy as np


def ge2e_kernel(dvec_ref, w_ref, b_ref, out_ref, *, n_spkr, n_uttr):
    S, U = n_spkr, n_uttr
    SU, D = dvec_ref.shape
    inv_u = 1.0 / U
    inv_um1 = 1.0 / (U - 1)
    inv_su = 1.0 / SU
    inv_neg = 1.0 / (SU * (S - 1))

    dvec = dvec_ref[...].astype(jnp.float32)            # [S*U, D]
    w = w_ref[0]
    b = b_ref[0]

    # ---- speaker membership masks built in-kernel (no HBM constant stream) --
    # same_b[s, j] = True iff flattened utterance j belongs to speaker s.
    # (avoid integer division:  j // U == s  <=>  s*U <= j < (s+1)*U)
    row = lax.broadcasted_iota(jnp.int32, (S, SU), 0)
    col = lax.broadcasted_iota(jnp.int32, (S, SU), 1)
    lo = row * U
    same_b = jnp.logical_and(col >= lo, col < lo + U)    # [S, S*U] bool
    same_f = same_b.astype(jnp.float32)                  # [S, S*U] 0/1
    # transposed copy built directly (cheap iota, no relayout/transpose op)
    row_t = lax.broadcasted_iota(jnp.int32, (SU, S), 0)
    col_t = lax.broadcasted_iota(jnp.int32, (SU, S), 1)
    lo_t = col_t * U
    same_t = jnp.logical_and(row_t >= lo_t, row_t < lo_t + U).astype(jnp.float32)  # [S*U, S]

    # ---- per-speaker sums via one MXU matmul (reused by both paths) ----------
    spk_sum = lax.dot_general(same_f, dvec, (((1,), (0,)), ((), ())),
                              preferred_element_type=jnp.float32)       # [S, D]
    ss2 = jnp.sum(spk_sum * spk_sum, axis=-1, keepdims=True)            # [S, 1]

    # ---- negative cosine matrix, lane-dense [S, S*U] -------------------------
    # Pre-normalize both operands (eps = 1e-8 per factor, torch default) so a
    # single MXU dot yields the cosine matrix directly.
    nd2 = jnp.sum(dvec * dvec, axis=-1, keepdims=True)                  # [S*U, 1]
    dvec_n = dvec * lax.rsqrt(jnp.maximum(nd2, 1e-16))                  # [S*U, D]
    nc2 = ss2 * (inv_u * inv_u)                                         # ||centroid||^2
    cent_n = (spk_sum * inv_u) * lax.rsqrt(jnp.maximum(nc2, 1e-16))     # [S, D]
    neg_cos = lax.dot_general(cent_n, dvec_n, (((1,), (1,)), ((), ())),
                              preferred_element_type=jnp.float32)       # [S, S*U]

    # ---- positive cosine WITHOUT materializing pos_cent ----------------------
    # Broadcast spk_sum / |spk_sum|^2 back to utterances with the 0/1 matmul.
    spk_sum_utt = lax.dot_general(same_t, spk_sum, (((1,), (0,)), ((), ())),
                                  preferred_element_type=jnp.float32)   # [S*U, D]
    ss2_utt = lax.dot_general(same_t, ss2, (((1,), (0,)), ((), ())),
                              preferred_element_type=jnp.float32)       # [S*U, 1]
    dps = jnp.sum(dvec * spk_sum_utt, axis=-1, keepdims=True)           # [S*U, 1]
    dot_pos = (dps - nd2) * inv_um1                                     # <d, pos_cent>
    np2 = (ss2_utt - 2.0 * dps + nd2) * (inv_um1 * inv_um1)             # |pos_cent|^2
    # F.cosine_similarity(..., eps=1e-6): clamp each norm at eps.
    pos_cos = dot_pos * lax.rsqrt(jnp.maximum(nd2, 1e-12) *
                                  jnp.maximum(np2, 1e-12))              # [S*U, 1]

    # ---- means ----------------------------------------------------------------
    pos_mean = jnp.sum(pos_cos) * inv_su
    neg_mean = jnp.sum(jnp.where(same_b, 0.0, neg_cos)) * inv_neg

    # ---- GE2E softmax loss ----------------------------------------------------
    #   loss = mean_{s,u} [ -(w*pos_cos+b) + log sum_{s'!=s} exp(w*neg_cos+b) ]
    # Constant stabilizer m = |w| + b >= max(neg_sim) since |neg_cos| <= 1:
    # exponents are <= 0 (no overflow for any learned w) and the same-speaker
    # entries are removed with a boolean select (no inf*0 NaN path).
    m = jnp.abs(w) + b
    neg_sim = w * neg_cos + b                                           # [S, S*U]
    exp_neg = jnp.where(same_b, 0.0, jnp.exp(neg_sim - m))              # [S, S*U]
    logsum = jnp.log(jnp.sum(exp_neg, axis=0, keepdims=True)) + m       # [1, S*U]
    loss = jnp.sum(logsum) * inv_su - (w * pos_mean + b)

    out_ref[0] = loss
    out_ref[1] = pos_mean
    out_ref[2] = neg_mean


def ge2e_loss_pallas(dvectors, w, b):
    """GE2E softmax-loss forward.

    dvectors: [n_spkr, n_uttr, dim] float32;  w, b: shape (1,) float32 params.
    Returns (loss, pos_mean, neg_mean) like GE2ELoss.forward.
    """
    S, U, D = dvectors.shape
    # Single flattened view (contiguous reshape is free in XLA) -> the kernel
    # DMAs the d-vectors exactly once; no duplicated tensor, no mask stream.
    dvec2 = dvectors.reshape(S * U, D)

    kernel = functools.partial(ge2e_kernel, n_spkr=S, n_uttr=U)
    vmem = pl.BlockSpec(memory_space=pltpu.MemorySpace.VMEM)
    smem = pl.BlockSpec(memory_space=pltpu.MemorySpace.SMEM)
    out = pl.pallas_call(
        kernel,
        out_shape=jax.ShapeDtypeStruct((3,), jnp.float32),
        in_specs=[vmem, smem, smem],
        out_specs=smem,
        compiler_params=pltpu.CompilerParams(vmem_limit_bytes=32 * 1024 * 1024),
    )(dvec2, w, b)
    return out[0], out[1], out[2]


# ----------------------------- pure-JAX reference ----------------------------
def ge2e_loss_ref(dvec, w, b):
    S, U, D = dvec.shape
    cent = dvec.mean(axis=1)                                   # [S, D]
    spk_sum = dvec.sum(axis=1, keepdims=True)                  # [S, 1, D]
    pos_cent = (spk_sum - dvec) / (U - 1)                      # [S, U, D]

    def cos(a, b_, eps):
        na = jnp.sqrt(jnp.sum(a * a, -1))
        nb = jnp.sqrt(jnp.sum(b_ * b_, -1))
        return jnp.sum(a * b_, -1) / (jnp.maximum(na, eps) * jnp.maximum(nb, eps))

    pos_cos = cos(dvec, pos_cent, 1e-6)                        # [S, U]
    nd = jnp.sqrt(jnp.sum(dvec * dvec, -1))                    # [S, U]
    nc = jnp.sqrt(jnp.sum(cent * cent, -1))                    # [S]
    dots = jnp.einsum('sud,jd->suj', dvec, cent)
    neg_cos = dots / (jnp.maximum(nd, 1e-8)[..., None] *
                      jnp.maximum(nc, 1e-8)[None, None, :])    # [S, U, S]
    mask = jnp.broadcast_to(
        jnp.arange(S)[:, None, None] != jnp.arange(S)[None, None, :], (S, U, S))

    pos_mean = pos_cos.mean()
    neg_mean = jnp.where(mask, neg_cos, 0.0).sum() / (S * U * (S - 1))
    pos_sim = w * pos_cos + b
    neg_sim = w * neg_cos + b
    logsum = jnp.log(jnp.where(mask, jnp.exp(neg_sim), 0.0).sum(axis=2))
    loss = (-pos_sim + logsum).mean()
    return loss, pos_mean, neg_mean


if __name__ == "__main__":
    # deterministic parameters, matching nn.Parameter([10.0]) / ([-5.0])
    w = jnp.array([10.0], dtype=jnp.float32)
    b = jnp.array([-5.0], dtype=jnp.float32)

    # small d-vector batch: 4 speakers x 8 utterances x 32-dim embeddings
    n_spkr, n_uttr, dim = 4, 8, 32
    key = jax.random.PRNGKey(0)
    dvectors = jax.random.normal(key, (n_spkr, n_uttr, dim), dtype=jnp.float32)

    loss, pos_mean, neg_mean = ge2e_loss_pallas(dvectors, w, b)
    jax.block_until_ready((loss, pos_mean, neg_mean))

    ref_loss, ref_pm, ref_nm = ge2e_loss_ref(dvectors, w[0], b[0])
    np.testing.assert_allclose(np.asarray(loss), np.asarray(ref_loss), rtol=1e-4, atol=1e-4)
    np.testing.assert_allclose(np.asarray(pos_mean), np.asarray(ref_pm), rtol=1e-4, atol=1e-4)
    np.testing.assert_allclose(np.asarray(neg_mean), np.asarray(ref_nm), rtol=1e-4, atol=1e-4)

    print("KERNEL_OK")
</pallas_src>

<mosaic_0001>
module attributes {stable_mosaic.version = 11 : i64} {
  func.func @ge2e_kernel(%arg0: memref<32x32xf32, #tpu.memory_space<vmem>>, %arg1: memref<1xf32, #tpu.memory_space<smem>>, %arg2: memref<1xf32, #tpu.memory_space<smem>>, %arg3: memref<3xf32, #tpu.memory_space<smem>>) attributes {dimension_semantics = [], scalar_prefetch = 0 : i64, scratch_operands = 0 : i64, tpu.core_type = #tpu.core_type<tc>} {
    %c0 = arith.constant 0 : index
    %c0_0 = arith.constant 0 : index
    %0 = vector.load %arg0[%c0, %c0_0] : memref<32x32xf32, #tpu.memory_space<vmem>>, vector<32x32xf32>
    %c0_1 = arith.constant 0 : index
    %1 = memref.load %arg1[%c0_1] : memref<1xf32, #tpu.memory_space<smem>>
    %c0_2 = arith.constant 0 : index
    %2 = memref.load %arg2[%c0_2] : memref<1xf32, #tpu.memory_space<smem>>
    %3 = tpu.iota {dimensions = array<i32: 0>} : vector<4x32xi32>
    %4 = tpu.iota {dimensions = array<i32: 1>} : vector<4x32xi32>
    %c8_i32 = arith.constant 8 : i32
    %5 = vector.broadcast %c8_i32 : i32 to vector<4x32xi32>
    %6 = arith.muli %3, %5 : vector<4x32xi32>
    %7 = arith.cmpi sge, %4, %6 : vector<4x32xi32>
    %c8_i32_3 = arith.constant 8 : i32
    %8 = vector.broadcast %c8_i32_3 : i32 to vector<4x32xi32>
    %9 = arith.addi %6, %8 : vector<4x32xi32>
    %10 = arith.cmpi slt, %4, %9 : vector<4x32xi32>
    %11 = arith.andi %7, %10 : vector<4x32xi1>
    %12 = arith.extui %11 : vector<4x32xi1> to vector<4x32xi32>
    %13 = arith.sitofp %12 : vector<4x32xi32> to vector<4x32xf32>
    %14 = tpu.iota {dimensions = array<i32: 0>} : vector<32x4xi32>
    %15 = tpu.iota {dimensions = array<i32: 1>} : vector<32x4xi32>
    %c8_i32_4 = arith.constant 8 : i32
    %16 = vector.broadcast %c8_i32_4 : i32 to vector<32x4xi32>
    %17 = arith.muli %15, %16 : vector<32x4xi32>
    %18 = arith.cmpi sge, %14, %17 : vector<32x4xi32>
    %c8_i32_5 = arith.constant 8 : i32
    %19 = vector.broadcast %c8_i32_5 : i32 to vector<32x4xi32>
    %20 = arith.addi %17, %19 : vector<32x4xi32>
    %21 = arith.cmpi slt, %14, %20 : vector<32x4xi32>
    %22 = arith.andi %18, %21 : vector<32x4xi1>
    %23 = arith.extui %22 : vector<32x4xi1> to vector<32x4xi32>
    %24 = arith.sitofp %23 : vector<32x4xi32> to vector<32x4xf32>
    %cst = arith.constant dense<0.000000e+00> : vector<4x32xf32>
    %25 = tpu.matmul %13, %0, %cst {dimension_numbers = #tpu.dot_dimension_numbers<[1], [0], [0], [1], [0, 0, 1, 1], [], []>} : vector<4x32xf32>, vector<32x32xf32>, vector<4x32xf32> -> vector<4x32xf32>
    %26 = arith.mulf %25, %25 : vector<4x32xf32>
    %cst_6 = arith.constant dense<0.000000e+00> : vector<4xf32>
    %27 = vector.multi_reduction <add>, %26, %cst_6 [1] : vector<4x32xf32> to vector<4xf32>
    %28 = vector.shape_cast %27 : vector<4xf32> to vector<4x1xf32>
    %29 = arith.mulf %0, %0 : vector<32x32xf32>
    %cst_7 = arith.constant dense<0.000000e+00> : vector<32xf32>
    %30 = vector.multi_reduction <add>, %29, %cst_7 [1] : vector<32x32xf32> to vector<32xf32>
    %31 = vector.shape_cast %30 : vector<32xf32> to vector<32x1xf32>
    %cst_8 = arith.constant 1.000000e-16 : f32
    %32 = vector.broadcast %cst_8 : f32 to vector<32x1xf32>
    %33 = arith.maximumf %31, %32 : vector<32x1xf32>
    %34 = math.rsqrt %33 : vector<32x1xf32>
    %35 = vector.broadcast %34 : vector<32x1xf32> to vector<32x32xf32>
    %36 = arith.mulf %0, %35 : vector<32x32xf32>
    %cst_9 = arith.constant 1.562500e-02 : f32
    %37 = vector.broadcast %cst_9 : f32 to vector<4x1xf32>
    %38 = arith.mulf %28, %37 : vector<4x1xf32>
    %cst_10 = arith.constant 1.250000e-01 : f32
    %39 = vector.broadcast %cst_10 : f32 to vector<4x32xf32>
    %40 = arith.mulf %25, %39 : vector<4x32xf32>
    %cst_11 = arith.constant 1.000000e-16 : f32
    %41 = vector.broadcast %cst_11 : f32 to vector<4x1xf32>
    %42 = arith.maximumf %38, %41 : vector<4x1xf32>
    %43 = math.rsqrt %42 : vector<4x1xf32>
    %44 = vector.broadcast %43 : vector<4x1xf32> to vector<4x32xf32>
    %45 = arith.mulf %40, %44 : vector<4x32xf32>
    %cst_12 = arith.constant dense<0.000000e+00> : vector<4x32xf32>
    %46 = tpu.matmul %45, %36, %cst_12 {dimension_numbers = #tpu.dot_dimension_numbers<[1], [1], [0], [0], [0, 0, 1, 0], [], []>} : vector<4x32xf32>, vector<32x32xf32>, vector<4x32xf32> -> vector<4x32xf32>
    %cst_13 = arith.constant dense<0.000000e+00> : vector<32x32xf32>
    %47 = tpu.matmul %24, %25, %cst_13 {dimension_numbers = #tpu.dot_dimension_numbers<[1], [0], [0], [1], [0, 0, 1, 1], [], []>} : vector<32x4xf32>, vector<4x32xf32>, vector<32x32xf32> -> vector<32x32xf32>
    %cst_14 = arith.constant dense<0.000000e+00> : vector<32x1xf32>
    %48 = tpu.matmul %24, %28, %cst_14 {dimension_numbers = #tpu.dot_dimension_numbers<[1], [0], [0], [1], [0, 0, 1, 1], [], []>} : vector<32x4xf32>, vector<4x1xf32>, vector<32x1xf32> -> vector<32x1xf32>
    %49 = arith.mulf %0, %47 : vector<32x32xf32>
    %cst_15 = arith.constant dense<0.000000e+00> : vector<32xf32>
    %50 = vector.multi_reduction <add>, %49, %cst_15 [1] : vector<32x32xf32> to vector<32xf32>
    %51 = vector.shape_cast %50 : vector<32xf32> to vector<32x1xf32>
    %52 = arith.subf %51, %31 : vector<32x1xf32>
    %cst_16 = arith.constant 0.142857149 : f32
    %53 = vector.broadcast %cst_16 : f32 to vector<32x1xf32>
    %54 = arith.mulf %52, %53 : vector<32x1xf32>
    %cst_17 = arith.constant 2.000000e+00 : f32
    %55 = vector.broadcast %cst_17 : f32 to vector<32x1xf32>
    %56 = arith.mulf %55, %51 : vector<32x1xf32>
    %57 = arith.subf %48, %56 : vector<32x1xf32>
    %58 = arith.addf %57, %31 : vector<32x1xf32>
    %cst_18 = arith.constant 0.0204081628 : f32
    %59 = vector.broadcast %cst_18 : f32 to vector<32x1xf32>
    %60 = arith.mulf %58, %59 : vector<32x1xf32>
    %cst_19 = arith.constant 9.99999996E-13 : f32
    %61 = vector.broadcast %cst_19 : f32 to vector<32x1xf32>
    %62 = arith.maximumf %31, %61 : vector<32x1xf32>
    %cst_20 = arith.constant 9.99999996E-13 : f32
    %63 = vector.broadcast %cst_20 : f32 to vector<32x1xf32>
    %64 = arith.maximumf %60, %63 : vector<32x1xf32>
    %65 = arith.mulf %62, %64 : vector<32x1xf32>
    %66 = math.rsqrt %65 : vector<32x1xf32>
    %67 = arith.mulf %54, %66 : vector<32x1xf32>
    %68 = vector.shape_cast %67 : vector<32x1xf32> to vector<1x32x1xf32>
    %cst_21 = arith.constant dense<0.000000e+00> : vector<1xf32>
    %69 = vector.multi_reduction <add>, %68, %cst_21 [1, 2] : vector<1x32x1xf32> to vector<1xf32>
    %70 = vector.shape_cast %69 : vector<1xf32> to vector<1x1x1xf32>
    %71 = vector.extract %70[0, 0, 0] : f32 from vector<1x1x1xf32>
    %cst_22 = arith.constant 3.125000e-02 : f32
    %72 = arith.mulf %71, %cst_22 : f32
    %cst_23 = arith.constant 0.000000e+00 : f32
    %73 = vector.broadcast %cst_23 : f32 to vector<4x32xf32>
    %74 = arith.select %11, %73, %46 : vector<4x32xi1>, vector<4x32xf32>
    %75 = vector.shape_cast %74 : vector<4x32xf32> to vector<1x4x32xf32>
    %cst_24 = arith.constant dense<0.000000e+00> : vector<1xf32>
    %76 = vector.multi_reduction <add>, %75, %cst_24 [1, 2] : vector<1x4x32xf32> to vector<1xf32>
    %77 = vector.shape_cast %76 : vector<1xf32> to vector<1x1x1xf32>
    %78 = vector.extract %77[0, 0, 0] : f32 from vector<1x1x1xf32>
    %cst_25 = arith.constant 0.010416667 : f32
    %79 = arith.mulf %78, %cst_25 : f32
    %80 = math.absf %1 : f32
    %81 = arith.addf %80, %2 : f32
    %82 = vector.broadcast %1 : f32 to vector<4x32xf32>
    %83 = arith.mulf %82, %46 : vector<4x32xf32>
    %84 = vector.broadcast %2 : f32 to vector<4x32xf32>
    %85 = arith.addf %83, %84 : vector<4x32xf32>
    %86 = vector.broadcast %81 : f32 to vector<4x32xf32>
    %87 = arith.subf %85, %86 : vector<4x32xf32>
    %88 = math.exp %87 : vector<4x32xf32>
    %cst_26 = arith.constant 0.000000e+00 : f32
    %89 = vector.broadcast %cst_26 : f32 to vector<4x32xf32>
    %90 = arith.select %11, %89, %88 : vector<4x32xi1>, vector<4x32xf32>
    %cst_27 = arith.constant dense<0.000000e+00> : vector<32xf32>
    %91 = vector.multi_reduction <add>, %90, %cst_27 [0] : vector<4x32xf32> to vector<32xf32>
    %92 = vector.shape_cast %91 : vector<32xf32> to vector<1x32xf32>
    %93 = math.log %92 : vector<1x32xf32>
    %94 = vector.broadcast %81 : f32 to vector<1x32xf32>
    %95 = arith.addf %93, %94 : vector<1x32xf32>
    %96 = vector.shape_cast %95 : vector<1x32xf32> to vector<1x1x32xf32>
    %cst_28 = arith.constant dense<0.000000e+00> : vector<1xf32>
    %97 = vector.multi_reduction <add>, %96, %cst_28 [1, 2] : vector<1x1x32xf32> to vector<1xf32>
    %98 = vector.shape_cast %97 : vector<1xf32> to vector<1x1x1xf32>
    %99 = vector.extract %98[0, 0, 0] : f32 from vector<1x1x1xf32>
    %cst_29 = arith.constant 3.125000e-02 : f32
    %100 = arith.mulf %99, %cst_29 : f32
    %101 = arith.mulf %1, %72 : f32
    %102 = arith.addf %101, %2 : f32
    %103 = arith.subf %100, %102 : f32
    %c0_30 = arith.constant 0 : index
    %104 = memref.load %arg3[%c0_30] : memref<3xf32, #tpu.memory_space<smem>>
    memref.store %103, %arg3[%c0_30] : memref<3xf32, #tpu.memory_space<smem>>
    %c1 = arith.constant 1 : index
    %105 = memref.load %arg3[%c1] : memref<3xf32, #tpu.memory_space<smem>>
    memref.store %72, %arg3[%c1] : memref<3xf32, #tpu.memory_space<smem>>
    %c2 = arith.constant 2 : index
    %106 = memref.load %arg3[%c2] : memref<3xf32, #tpu.memory_space<smem>>
    memref.store %79, %arg3[%c2] : memref<3xf32, #tpu.memory_space<smem>>
    return
  }
}

</mosaic_0001>

<llo_original>
// kernel: tpu_custom_call.1
$region0: #{tpu_custom_call.1}
  #allocation0 [shape = 'u32[]', space=smem, size = 0x4, offset = 0x4, fixed_abs, tag = 'smem constant byte address 0x4 - core index']
  #allocation1 [shape = 'u32[144,128]{1,0:T(1,128)}', space=vmem, size = 0x12000, scoped, tag = 'internal scratch']
  #allocation2 [shape = 'f32[1]{0:T(128)S(6)}', space=smem, size = 0x200, scoped, tag = 'scoped memory for tpu_custom_call.1']
  #allocation3 [shape = 'f32[1]{0:T(128)S(6)}', space=smem, size = 0x200, scoped, tag = 'scoped memory for tpu_custom_call.1']
  %s0 = inlined_call_operand.hbm [shape: f32[32,32], index: 0, kind: input, shape index: {}]
  %s1 = inlined_call_operand.<no memory space> [shape: f32[1], index: 1, kind: input, shape index: {}]
  %s2 = inlined_call_operand.<no memory space> [shape: f32[1], index: 2, kind: input, shape index: {}]
  %s3 = inlined_call_operand.hbm [shape: f32[3], index: 3, kind: output, shape index: {}]
  %s4 = sld [smem:[#allocation0]]
  $region26: #{tpu_custom_call.1} parent=0
    _
  %s6 = ssub.s32 1, %s4
  %s7 = scalar_select 0, %s6, %s4
  %8 = sst [smem:[#allocation2]] %s1
  %9 = sst [smem:[#allocation3]] %s2
  $region1: #{tpu_custom_call.1} parent=0
    #allocation4 [shape = 'u8[16384]{0}', space=vmem, size = 0x4000, scoped, tag = 'input window, operand 0, single buffered']
    #allocation5 [shape = 's32[1]{0}', space=sflag, size = 0x4, scoped, tag = 'scoped memory for tpu_custom_call.1']
    #allocation6 [shape = 's32[1]{0}', space=sflag, size = 0x4, scoped, tag = 'scoped memory for tpu_custom_call.1']
    #allocation7 [shape = 'u8[512]{0}', space=smem, size = 0x200, scoped, tag = 'output window, operand 0, single buffered']
    %10 = vsyncpa [#allocation5], 0
    %11 = vsyncpa [#allocation6], 0
    // Predicated region
    $region2: #{tpu_custom_call.1} parent=1 // pred_check
      _
    $region3: #{tpu_custom_call.1} parent=1 // pred_check_branch
      %13 = sbr.rel (0) target = $region5
    $region4: #{tpu_custom_call.1} parent=1 // pred_region
      %s15 = ssub.s32 512, 512
      %16 = vsyncadd [#allocation5], %s15
      %s17 = sshll.u32 [#allocation4], 4
      %s18 = int_to_ptr.vmem [resolvable:$true] %s17
      %23 = dma.hbm_to_vmem [thread:$0]  %s0, 512, %s18, [#allocation5], 128, 128, 8
    $region5: #{tpu_custom_call.1} parent=1 // pred_fallthru
      _
    // Predicated region
    $region6: #{tpu_custom_call.1} parent=1 // pred_check
      _
    $region7: #{tpu_custom_call.1} parent=1 // pred_check_branch
      %25 = sbr.rel (0) target = $region9
    $region8: #{tpu_custom_call.1} parent=1 // pred_region
      _
    $region9: #{tpu_custom_call.1} parent=1 // pred_fallthru
      _
    // Predicated region
    $region10: #{tpu_custom_call.1} parent=1 // pred_check
      _
    $region11: #{tpu_custom_call.1} parent=1 // pred_check_branch
      %27 = sbr.rel (0) target = $region13
    $region12: #{tpu_custom_call.1} parent=1 // pred_region
      _
    $region13: #{tpu_custom_call.1} parent=1 // pred_fallthru
      _
    // Predicated region
    $region14: #{tpu_custom_call.1} parent=1 // pred_check
      _
    $region15: #{tpu_custom_call.1} parent=1 // pred_check_branch
      %29 = sbr.rel (0) target = $region17
    $region16: #{tpu_custom_call.1} parent=1 // pred_region
      %30 = dma.done [#allocation5], 512
    $region17: #{tpu_custom_call.1} parent=1 // pred_fallthru
      _
    %v31 = vld [vmem:[#allocation4] sm:$0xff]
    %v32 = vld [vmem:[#allocation4 + $0x8] sm:$0xff]
    %v33 = vld [vmem:[#allocation4 + $0x10] sm:$0xff]
    %v34 = vld [vmem:[#allocation4 + $0x18] sm:$0xff]
    %s35 = sld [smem:[#allocation2]]
    %s36 = sld [smem:[#allocation3]]
    %v37 = vlaneseq
    %v38 = vshrl.u32 %v37, 7
    %v39 = vlaneseq
    %v40 = vand.u32 %v39, 127
    %v41 = vmul.u32 %v38, 8
    %vm42 = vcmp.ge.s32.totalorder %v40, %v41
    %v43 = vadd.s32 %v41, 8
    %vm44 = vcmp.lt.s32.totalorder %v40, %v43
    %vm45 = vmand %vm42, %vm44
    %v46 = vsel %vm45, 1, 0
    %v47 = vcvt.s32.f32 %v46
    %v48 = vadd.s32 %v38, 8
    %v49 = vadd.s32 %v38, 16
    %v50 = vadd.s32 %v38, 24
    %v51 = vmul.u32 %v40, 8
    %vm52 = vcmp.ge.s32.totalorder %v38, %v51
    %vm53 = vcmp.ge.s32.totalorder %v48, %v51
    %vm54 = vcmp.ge.s32.totalorder %v49, %v51
    %vm55 = vcmp.ge.s32.totalorder %v50, %v51
    %v56 = vadd.s32 %v51, 8
    %vm57 = vcmp.lt.s32.totalorder %v38, %v56
    %vm58 = vcmp.lt.s32.totalorder %v48, %v56
    %vm59 = vcmp.lt.s32.totalorder %v49, %v56
    %vm60 = vcmp.lt.s32.totalorder %v50, %v56
    %vm61 = vmand %vm52, %vm57
    %vm62 = vmand %vm53, %vm58
    %vm63 = vmand %vm54, %vm59
    %vm64 = vmand %vm55, %vm60
    %v65 = vsel %vm61, 1, 0
    %v66 = vsel %vm62, 1, 0
    %v67 = vsel %vm63, 1, 0
    %v68 = vsel %vm64, 1, 0
    %v69 = vcvt.s32.f32 %v65
    %v70 = vcvt.s32.f32 %v66
    %v71 = vcvt.s32.f32 %v67
    %v72 = vcvt.s32.f32 %v68
    %vm73 = vcmask 261120
    %v75 = vsel %vm73, %v47, 0
    %77 = vmatprep.subr.mxu0 0.0
    %78 = vmatpush1.msra.mxu0 %v31
    %79 = vmatprep.subr.mxu0 0.0
    %80 = vmatpush1.msra.mxu0 %v32
    %81 = vmatprep.subr.mxu0 0.0
    %82 = vmatpush1.msra.mxu0 %v33
    %83 = vmatprep.subr.mxu0 0.0
    %84 = vmatpush1.msra.mxu0 %v34
    %85 = vmatprep.subr.mxu0 0.0
    %86 = vmatpush1.msra.mxu0 0.0
    %87 = vmatprep.subr.mxu0 0.0
    %88 = vmatpush1.msra.mxu0 0.0
    %89 = vmatprep.subr.mxu0 0.0
    %90 = vmatpush1.msra.mxu0 0.0
    %91 = vmatprep.subr.mxu0 0.0
    %92 = vmatpush1.msra.mxu0 0.0
    %93 = vmatprep.subr.mxu0 0.0
    %94 = vmatpush1.msra.mxu0 0.0
    %95 = vmatprep.subr.mxu0 0.0
    %96 = vmatpush1.msra.mxu0 0.0
    %97 = vmatprep.subr.mxu0 0.0
    %98 = vmatpush1.msra.mxu0 0.0
    %99 = vmatprep.subr.mxu0 0.0
    %100 = vmatpush1.msra.mxu0 0.0
    %101 = vmatprep.subr.mxu0 0.0
    %102 = vmatpush1.msra.mxu0 0.0
    %103 = vmatprep.subr.mxu0 0.0
    %104 = vmatpush1.msra.mxu0 0.0
    %105 = vmatprep.subr.mxu0 0.0
    %106 = vmatpush1.msra.mxu0 0.0
    %107 = vmatprep.subr.mxu0 0.0
    %108 = vmatpush1.msra.mxu0 0.0
    %109 = vmatprep.subr.mxu0 0.0
    %110 = vmatpush1.msra.mxu0 0.0
    %111 = vmatprep.subr.mxu0 0.0
    %112 = vmatpush1.msra.mxu0 0.0
    %113 = vmatprep.subr.mxu0 0.0
    %114 = vmatpush1.msra.mxu0 0.0
    %115 = vmatprep.subr.mxu0 0.0
    %116 = vmatpush1.msra.mxu0 0.0
    %117 = vmatprep.subr.mxu0 0.0
    %118 = vmatpush1.msra.mxu0 0.0
    %119 = vmatprep.subr.mxu0 0.0
    %120 = vmatpush1.msra.mxu0 0.0
    %121 = vmatprep.subr.mxu0 0.0
    %122 = vmatpush1.msra.mxu0 0.0
    %123 = vmatprep.subr.mxu0 0.0
    %124 = vmatpush1.msra.mxu0 0.0
    %125 = vmatprep.subr.mxu0 0.0
    %126 = vmatpush1.msra.mxu0 0.0
    %127 = vmatprep.subr.mxu0 0.0
    %128 = vmatpush1.msra.mxu0 0.0
    %129 = vmatprep.subr.mxu0 0.0
    %130 = vmatpush1.msra.mxu0 0.0
    %131 = vmatprep.subr.mxu0 0.0
    %132 = vmatpush1.msra.mxu0 0.0
    %133 = vmatprep.subr.mxu0 0.0
    %134 = vmatpush1.msra.mxu0 0.0
    %135 = vmatprep.subr.mxu0 0.0
    %136 = vmatpush1.msra.mxu0 0.0
    %137 = vmatprep.subr.mxu0 0.0
    %138 = vmatpush1.msra.mxu0 0.0
    %139 = vmatprep.subr.mxu0 0.0
    %140 = vmatpush1.msra.mxu0 0.0
    %141 = vmatprep.mubr.f32.mxu0 0.0
    %142 = vmatmul.mubr.f32.gmra.mrb[0].mxu0 %v75
    %v143 = vpop.f32.mrb[0].mxu0
    %v144 = vadd.f32 0.0, %v143
    %v145 = vpop.f32.mrb[0].mxu0
    %146 = vdwg.mxu0
    %v147 = vmul.f32 %v144, %v144
    %vm148 = vcmask 257024
    %v149 = vsel %vm148, %v147, 0.0
    %150 = vadd.xlane.f32.xlu0 %v149
    %v151 = vpop.xlane.xlu0 %150
    %v152 = vmul.f32 %v31, %v31
    %v153 = vmul.f32 %v32, %v32
    %v154 = vmul.f32 %v33, %v33
    %v155 = vmul.f32 %v34, %v34
    %v156 = vsel %vm73, %v152, 0.0
    %157 = vadd.xlane.f32.xlu0 %v156
    %v158 = vpop.xlane.xlu0 %157
    %v159 = vsel %vm73, %v153, 0.0
    %160 = vadd.xlane.f32.xlu0 %v159
    %v161 = vpop.xlane.xlu0 %160
    %v162 = vsel %vm73, %v154, 0.0
    %163 = vadd.xlane.f32.xlu0 %v162
    %v164 = vpop.xlane.xlu0 %163
    %v165 = vsel %vm73, %v155, 0.0
    %166 = vadd.xlane.f32.xlu0 %v165
    %v167 = vpop.xlane.xlu0 %166
    %v168 = vmax.f32 %v158, 1e-16
    %v169 = vmax.f32 %v161, 1e-16
    %v170 = vmax.f32 %v164, 1e-16
    %v171 = vmax.f32 %v167, 1e-16
    %v172 = vrsqrt.pop %v168
    %v173 = vrsqrt.pop %v169
    %v174 = vrsqrt.pop %v170
    %v175 = vrsqrt.pop %v171
    %v176 = vmul.f32 %v31, %v172
    %v177 = vmul.f32 %v32, %v173
    %v178 = vmul.f32 %v33, %v174
    %v179 = vmul.f32 %v34, %v175
    %v180 = vmul.f32 %v151, 0.015625
    %v181 = vmul.f32 %v144, 0.125
    %v182 = vmax.f32 %v180, 1e-16
    %v183 = vrsqrt.pop %v182
    %v184 = vmul.f32 %v181, %v183
    %v186 = vsel %vm73, %v184, 0
    %v189 = vsel %vm73, %v176, 0
    %v192 = vsel %vm73, %v177, 0
    %v195 = vsel %vm73, %v178, 0
    %v198 = vsel %vm73, %v179, 0
    %200 = vmatprep.subr.mxu0 0.0
    %201 = vmatpush1.xpose.msra.mxu0 %v189
    %202 = vmatprep.subr.mxu0 0.0
    %203 = vmatpush1.xpose.msra.mxu0 %v192
    %204 = vmatprep.subr.mxu0 0.0
    %205 = vmatpush1.xpose.msra.mxu0 %v195
    %206 = vmatprep.subr.mxu0 0.0
    %207 = vmatpush1.xpose.msra.mxu0 %v198
    %208 = vmatprep.subr.mxu0 0.0
    %209 = vmatpush1.xpose.msra.mxu0 0.0
    %210 = vmatprep.subr.mxu0 0.0
    %211 = vmatpush1.xpose.msra.mxu0 0.0
    %212 = vmatprep.subr.mxu0 0.0
    %213 = vmatpush1.xpose.msra.mxu0 0.0
    %214 = vmatprep.subr.mxu0 0.0
    %215 = vmatpush1.xpose.msra.mxu0 0.0
    %216 = vmatprep.subr.mxu0 0.0
    %217 = vmatpush1.xpose.msra.mxu0 0.0
    %218 = vmatprep.subr.mxu0 0.0
    %219 = vmatpush1.xpose.msra.mxu0 0.0
    %220 = vmatprep.subr.mxu0 0.0
    %221 = vmatpush1.xpose.msra.mxu0 0.0
    %222 = vmatprep.subr.mxu0 0.0
    %223 = vmatpush1.xpose.msra.mxu0 0.0
    %224 = vmatprep.subr.mxu0 0.0
    %225 = vmatpush1.xpose.msra.mxu0 0.0
    %226 = vmatprep.subr.mxu0 0.0
    %227 = vmatpush1.xpose.msra.mxu0 0.0
    %228 = vmatprep.subr.mxu0 0.0
    %229 = vmatpush1.xpose.msra.mxu0 0.0
    %230 = vmatprep.subr.mxu0 0.0
    %231 = vmatpush1.xpose.msra.mxu0 0.0
    %232 = vmatprep.subr.mxu0 0.0
    %233 = vmatpush1.xpose.msra.mxu0 0.0
    %234 = vmatprep.subr.mxu0 0.0
    %235 = vmatpush1.xpose.msra.mxu0 0.0
    %236 = vmatprep.subr.mxu0 0.0
    %237 = vmatpush1.xpose.msra.mxu0 0.0
    %238 = vmatprep.subr.mxu0 0.0
    %239 = vmatpush1.xpose.msra.mxu0 0.0
    %240 = vmatprep.subr.mxu0 0.0
    %241 = vmatpush1.xpose.msra.mxu0 0.0
    %242 = vmatprep.subr.mxu0 0.0
    %243 = vmatpush1.xpose.msra.mxu0 0.0
    %244 = vmatprep.subr.mxu0 0.0
    %245 = vmatpush1.xpose.msra.mxu0 0.0
    %246 = vmatprep.subr.mxu0 0.0
    %247 = vmatpush1.xpose.msra.mxu0 0.0
    %248 = vmatprep.subr.mxu0 0.0
    %249 = vmatpush1.xpose.msra.mxu0 0.0
    %250 = vmatprep.subr.mxu0 0.0
    %251 = vmatpush1.xpose.msra.mxu0 0.0
    %252 = vmatprep.subr.mxu0 0.0
    %253 = vmatpush1.xpose.msra.mxu0 0.0
    %254 = vmatprep.subr.mxu0 0.0
    %255 = vmatpush1.xpose.msra.mxu0 0.0
    %256 = vmatprep.subr.mxu0 0.0
    %257 = vmatpush1.xpose.msra.mxu0 0.0
    %258 = vmatprep.subr.mxu0 0.0
    %259 = vmatpush1.xpose.msra.mxu0 0.0
    %260 = vmatprep.subr.mxu0 0.0
    %261 = vmatpush1.xpose.msra.mxu0 0.0
    %262 = vmatprep.subr.mxu0 0.0
    %263 = vmatpush1.xpose.msra.mxu0 0.0
    %264 = vmatprep.mubr.f32.mxu0 0.0
    %265 = vmatmul.mubr.f32.gmra.mrb[0].mxu0 %v186
    %v266 = vpop.f32.mrb[0].mxu0
    %v267 = vadd.f32 0.0, %v266
    %v268 = vpop.f32.mrb[0].mxu0
    %269 = vdwg.mxu0
    %vm270 = vcmask 31744
    %v272 = vsel %vm270, %v69, 0
    %v275 = vsel %vm270, %v70, 0
    %v278 = vsel %vm270, %v71, 0
    %v281 = vsel %vm270, %v72, 0
    %vm283 = vcmask 1043456
    %v285 = vsel %vm283, %v144, 0
    %287 = vmatprep.subr.mxu0 0.0
    %288 = vmatpush1.msra.mxu0 %v285
    %289 = vmatprep.subr.mxu0 0.0
    %290 = vmatpush1.msra.mxu0 0.0
    %291 = vmatprep.subr.mxu0 0.0
    %292 = vmatpush1.msra.mxu0 0.0
    %293 = vmatprep.subr.mxu0 0.0
    %294 = vmatpush1.msra.mxu0 0.0
    %295 = vmatprep.subr.mxu0 0.0
    %296 = vmatpush1.msra.mxu0 0.0
    %297 = vmatprep.subr.mxu0 0.0
    %298 = vmatpush1.msra.mxu0 0.0
    %299 = vmatprep.subr.mxu0 0.0
    %300 = vmatpush1.msra.mxu0 0.0
    %301 = vmatprep.subr.mxu0 0.0
    %302 = vmatpush1.msra.mxu0 0.0
    %303 = vmatprep.subr.mxu0 0.0
    %304 = vmatpush1.msra.mxu0 0.0
    %305 = vmatprep.subr.mxu0 0.0
    %306 = vmatpush1.msra.mxu0 0.0
    %307 = vmatprep.subr.mxu0 0.0
    %308 = vmatpush1.msra.mxu0 0.0
    %309 = vmatprep.subr.mxu0 0.0
    %310 = vmatpush1.msra.mxu0 0.0
    %311 = vmatprep.subr.mxu0 0.0
    %312 = vmatpush1.msra.mxu0 0.0
    %313 = vmatprep.subr.mxu0 0.0
    %314 = vmatpush1.msra.mxu0 0.0
    %315 = vmatprep.subr.mxu0 0.0
    %316 = vmatpush1.msra.mxu0 0.0
    %317 = vmatprep.subr.mxu0 0.0
    %318 = vmatpush1.msra.mxu0 0.0
    %319 = vmatprep.subr.mxu0 0.0
    %320 = vmatpush1.msra.mxu0 0.0
    %321 = vmatprep.subr.mxu0 0.0
    %322 = vmatpush1.msra.mxu0 0.0
    %323 = vmatprep.subr.mxu0 0.0
    %324 = vmatpush1.msra.mxu0 0.0
    %325 = vmatprep.subr.mxu0 0.0
    %326 = vmatpush1.msra.mxu0 0.0
    %327 = vmatprep.subr.mxu0 0.0
    %328 = vmatpush1.msra.mxu0 0.0
    %329 = vmatprep.subr.mxu0 0.0
    %330 = vmatpush1.msra.mxu0 0.0
    %331 = vmatprep.subr.mxu0 0.0
    %332 = vmatpush1.msra.mxu0 0.0
    %333 = vmatprep.subr.mxu0 0.0
    %334 = vmatpush1.msra.mxu0 0.0
    %335 = vmatprep.subr.mxu0 0.0
    %336 = vmatpush1.msra.mxu0 0.0
    %337 = vmatprep.subr.mxu0 0.0
    %338 = vmatpush1.msra.mxu0 0.0
    %339 = vmatprep.subr.mxu0 0.0
    %340 = vmatpush1.msra.mxu0 0.0
    %341 = vmatprep.subr.mxu0 0.0
    %342 = vmatpush1.msra.mxu0 0.0
    %343 = vmatprep.subr.mxu0 0.0
    %344 = vmatpush1.msra.mxu0 0.0
    %345 = vmatprep.subr.mxu0 0.0
    %346 = vmatpush1.msra.mxu0 0.0
    %347 = vmatprep.subr.mxu0 0.0
    %348 = vmatpush1.msra.mxu0 0.0
    %349 = vmatprep.subr.mxu0 0.0
    %350 = vmatpush1.msra.mxu0 0.0
    %351 = vmatprep.mubr.f32.mxu0 0.0
    %352 = vmatmul.mubr.f32.gmra.mrb[0].mxu0 %v272
    %v353 = vpop.f32.mrb[0].mxu0
    %v354 = vadd.f32 0.0, %v353
    %v355 = vpop.f32.mrb[0].mxu0
    %356 = vmatprep.mubr.f32.mxu0 0.0
    %357 = vmatmul.mubr.f32.gmra.mrb[0].mxu0 %v275
    %v358 = vpop.f32.mrb[0].mxu0
    %v359 = vadd.f32 0.0, %v358
    %v360 = vpop.f32.mrb[0].mxu0
    %361 = vmatprep.mubr.f32.mxu0 0.0
    %362 = vmatmul.mubr.f32.gmra.mrb[0].mxu0 %v278
    %v363 = vpop.f32.mrb[0].mxu0
    %v364 = vadd.f32 0.0, %v363
    %v365 = vpop.f32.mrb[0].mxu0
    %366 = vmatprep.mubr.f32.mxu0 0.0
    %367 = vmatmul.mubr.f32.gmra.mrb[0].mxu0 %v281
    %v368 = vpop.f32.mrb[0].mxu0
    %v369 = vadd.f32 0.0, %v368
    %v370 = vpop.f32.mrb[0].mxu0
    %371 = vdwg.mxu0
    %v373 = vsel %vm283, %v151, 0
    %375 = vmatprep.subr.mxu0 0.0
    %376 = vmatpush1.msra.mxu0 %v373
    %377 = vmatprep.subr.mxu0 0.0
    %378 = vmatpush1.msra.mxu0 0.0
    %379 = vmatprep.subr.mxu0 0.0
    %380 = vmatpush1.msra.mxu0 0.0
    %381 = vmatprep.subr.mxu0 0.0
    %382 = vmatpush1.msra.mxu0 0.0
    %383 = vmatprep.subr.mxu0 0.0
    %384 = vmatpush1.msra.mxu0 0.0
    %385 = vmatprep.subr.mxu0 0.0
    %386 = vmatpush1.msra.mxu0 0.0
    %387 = vmatprep.subr.mxu0 0.0
    %388 = vmatpush1.msra.mxu0 0.0
    %389 = vmatprep.subr.mxu0 0.0
    %390 = vmatpush1.msra.mxu0 0.0
    %391 = vmatprep.subr.mxu0 0.0
    %392 = vmatpush1.msra.mxu0 0.0
    %393 = vmatprep.subr.mxu0 0.0
    %394 = vmatpush1.msra.mxu0 0.0
    %395 = vmatprep.subr.mxu0 0.0
    %396 = vmatpush1.msra.mxu0 0.0
    %397 = vmatprep.subr.mxu0 0.0
    %398 = vmatpush1.msra.mxu0 0.0
    %399 = vmatprep.subr.mxu0 0.0
    %400 = vmatpush1.msra.mxu0 0.0
    %401 = vmatprep.subr.mxu0 0.0
    %402 = vmatpush1.msra.mxu0 0.0
    %403 = vmatprep.subr.mxu0 0.0
    %404 = vmatpush1.msra.mxu0 0.0
    %405 = vmatprep.subr.mxu0 0.0
    %406 = vmatpush1.msra.mxu0 0.0
    %407 = vmatprep.subr.mxu0 0.0
    %408 = vmatpush1.msra.mxu0 0.0
    %409 = vmatprep.subr.mxu0 0.0
    %410 = vmatpush1.msra.mxu0 0.0
    %411 = vmatprep.subr.mxu0 0.0
    %412 = vmatpush1.msra.mxu0 0.0
    %413 = vmatprep.subr.mxu0 0.0
    %414 = vmatpush1.msra.mxu0 0.0
    %415 = vmatprep.subr.mxu0 0.0
    %416 = vmatpush1.msra.mxu0 0.0
    %417 = vmatprep.subr.mxu0 0.0
    %418 = vmatpush1.msra.mxu0 0.0
    %419 = vmatprep.subr.mxu0 0.0
    %420 = vmatpush1.msra.mxu0 0.0
    %421 = vmatprep.subr.mxu0 0.0
    %422 = vmatpush1.msra.mxu0 0.0
    %423 = vmatprep.subr.mxu0 0.0
    %424 = vmatpush1.msra.mxu0 0.0
    %425 = vmatprep.subr.mxu0 0.0
    %426 = vmatpush1.msra.mxu0 0.0
    %427 = vmatprep.subr.mxu0 0.0
    %428 = vmatpush1.msra.mxu0 0.0
    %429 = vmatprep.subr.mxu0 0.0
    %430 = vmatpush1.msra.mxu0 0.0
    %431 = vmatprep.subr.mxu0 0.0
    %432 = vmatpush1.msra.mxu0 0.0
    %433 = vmatprep.subr.mxu0 0.0
    %434 = vmatpush1.msra.mxu0 0.0
    %435 = vmatprep.subr.mxu0 0.0
    %436 = vmatpush1.msra.mxu0 0.0
    %437 = vmatprep.subr.mxu0 0.0
    %438 = vmatpush1.msra.mxu0 0.0
    %439 = vmatprep.mubr.f32.mxu0 0.0
    %440 = vmatmul.mubr.f32.gmra.mrb[0].mxu0 %v272
    %v441 = vpop.f32.mrb[0].mxu0
    %v442 = vadd.f32 0.0, %v441
    %v443 = vpop.f32.mrb[0].mxu0
    %444 = vmatprep.mubr.f32.mxu0 0.0
    %445 = vmatmul.mubr.f32.gmra.mrb[0].mxu0 %v275
    %v446 = vpop.f32.mrb[0].mxu0
    %v447 = vadd.f32 0.0, %v446
    %v448 = vpop.f32.mrb[0].mxu0
    %449 = vmatprep.mubr.f32.mxu0 0.0
    %450 = vmatmul.mubr.f32.gmra.mrb[0].mxu0 %v278
    %v451 = vpop.f32.mrb[0].mxu0
    %v452 = vadd.f32 0.0, %v451
    %v453 = vpop.f32.mrb[0].mxu0
    %454 = vmatprep.mubr.f32.mxu0 0.0
    %455 = vmatmul.mubr.f32.gmra.mrb[0].mxu0 %v281
    %v456 = vpop.f32.mrb[0].mxu0
    %v457 = vadd.f32 0.0, %v456
    %v458 = vpop.f32.mrb[0].mxu0
    %459 = vdwg.mxu0
    %v460 = vmul.f32 %v31, %v354
    %v461 = vmul.f32 %v32, %v359
    %v462 = vmul.f32 %v33, %v364
    %v463 = vmul.f32 %v34, %v369
    %v464 = vsel %vm73, %v460, 0.0
    %465 = vadd.xlane.f32.xlu0 %v464
    %v466 = vpop.xlane.xlu0 %465
    %v467 = vsel %vm73, %v461, 0.0
    %468 = vadd.xlane.f32.xlu0 %v467
    %v469 = vpop.xlane.xlu0 %468
    %v470 = vsel %vm73, %v462, 0.0
    %471 = vadd.xlane.f32.xlu0 %v470
    %v472 = vpop.xlane.xlu0 %471
    %v473 = vsel %vm73, %v463, 0.0
    %474 = vadd.xlane.f32.xlu0 %v473
    %v475 = vpop.xlane.xlu0 %474
    %v476 = vsub.f32 %v466, %v158
    %v477 = vsub.f32 %v469, %v161
    %v478 = vsub.f32 %v472, %v164
    %v479 = vsub.f32 %v475, %v167
    %v480 = vmul.f32 %v476, 0.14285715
    %v481 = vmul.f32 %v477, 0.14285715
    %v482 = vmul.f32 %v478, 0.14285715
    %v483 = vmul.f32 %v479, 0.14285715
    %v484 = vmul.f32 %v466, 2.0
    %v485 = vmul.f32 %v469, 2.0
    %v486 = vmul.f32 %v472, 2.0
    %v487 = vmul.f32 %v475, 2.0
    %v488 = vsub.f32 %v442, %v484
    %v489 = vsub.f32 %v447, %v485
    %v490 = vsub.f32 %v452, %v486
    %v491 = vsub.f32 %v457, %v487
    %v492 = vadd.f32 %v488, %v158
    %v493 = vadd.f32 %v489, %v161
    %v494 = vadd.f32 %v490, %v164
    %v495 = vadd.f32 %v491, %v167
    %v496 = vmul.f32 %v492, 0.020408163
    %v497 = vmul.f32 %v493, 0.020408163
    %v498 = vmul.f32 %v494, 0.020408163
    %v499 = vmul.f32 %v495, 0.020408163
    %v500 = vmax.f32 %v158, 1e-12
    %v501 = vmax.f32 %v161, 1e-12
    %v502 = vmax.f32 %v164, 1e-12
    %v503 = vmax.f32 %v167, 1e-12
    %v504 = vmax.f32 %v496, 1e-12
    %v505 = vmax.f32 %v497, 1e-12
    %v506 = vmax.f32 %v498, 1e-12
    %v507 = vmax.f32 %v499, 1e-12
    %v508 = vmul.f32 %v500, %v504
    %v509 = vmul.f32 %v501, %v505
    %v510 = vmul.f32 %v502, %v506
    %v511 = vmul.f32 %v503, %v507
    %v512 = vrsqrt.pop %v508
    %v513 = vrsqrt.pop %v509
    %v514 = vrsqrt.pop %v510
    %v515 = vrsqrt.pop %v511
    %v516 = vmul.f32 %v480, %v512
    %v517 = vmul.f32 %v481, %v513
    %v518 = vmul.f32 %v482, %v514
    %v519 = vmul.f32 %v483, %v515
    %vm520 = vcmask 7168
    %v521 = vsel %vm520, %v516, 0.0
    %v522 = vsel %vm520, %v517, 0.0
    %v523 = vadd.f32 %v521, %v522
    %v524 = vsel %vm520, %v518, 0.0
    %v525 = vadd.f32 %v523, %v524
    %v526 = vsel %vm520, %v519, 0.0
    %v527 = vadd.f32 %v525, %v526
    %528 = vadd.xlane.f32.xlu0 %v527
    %v529 = vpop.xlane.xlu0 %528
    %v530 = vrot.slane %v529, 4
    %v531 = vadd.f32 %v529, %v530
    %v532 = vrot.slane %v531, 2
    %v533 = vadd.f32 %v531, %v532
    %v534 = vrot.slane %v533, 1
    %v535 = vadd.f32 %v533, %v534
    %s536 = vtos %v535
    %s537 = smul.f32 %s536, 0.03125
    %v538 = vsel %vm45, 0.0, %v267
    %v539 = vsel %vm148, %v538, 0.0
    %540 = vadd.xlane.f32.xlu0 %v539
    %v541 = vpop.xlane.xlu0 %540
    %v542 = vrot.slane %v541, 4
    %v543 = vadd.f32 %v541, %v542
    %v544 = vrot.slane %v543, 2
    %v545 = vadd.f32 %v543, %v544
    %v546 = vrot.slane %v545, 1
    %v547 = vadd.f32 %v545, %v546
    %s548 = vtos %v547
    %s549 = smul.f32 %s548, 0.010416667
    %s550 = sand.u32 2147483647, %s35
    %s551 = sadd.f32 %s550, %s36
    %v552 = vstv %s35
    %v553 = vmul.f32 %v552, %v267
    %v554 = vstv %s36
    %v555 = vadd.f32 %v553, %v554
    %v556 = vstv %s551
    %v557 = vsub.f32 %v555, %v556
    %v558 = vmul.f32 %v557, 1.442695
    %v559 = vpow.pop %v558
    %v560 = vsel %vm45, 0.0, %v559
    %v561 = vsel %vm148, %v560, 0.0
    %v562 = vrot.slane %v561, 4
    %v563 = vadd.f32 %v561, %v562
    %v564 = vrot.slane %v563, 2
    %v565 = vadd.f32 %v563, %v564
    %v566 = vrot.slane %v565, 1
    %v567 = vadd.f32 %v565, %v566
    %v568 = vlog2.pop %v567
    %v569 = vmul.f32 %v568, 0.6931472
    %v570 = vadd.f32 %v569, %v556
    %vm571 = vcmask 253952
    %v572 = vsel %vm571, %v570, 0.0
    %573 = vadd.xlane.f32.xlu0 %v572
    %v574 = vpop.xlane.xlu0 %573
    %v575 = vrot.slane %v574, 4
    %v576 = vadd.f32 %v574, %v575
    %v577 = vrot.slane %v576, 2
    %v578 = vadd.f32 %v576, %v577
    %v579 = vrot.slane %v578, 1
    %v580 = vadd.f32 %v578, %v579
    %s581 = vtos %v580
    %s582 = smul.f32 %s581, 0.03125
    %s583 = smul.f32 %s35, %s537
    %s584 = sadd.f32 %s583, %s36
    %s585 = ssub.f32 %s582, %s584
    %s586 = scalar_lea.smem [#allocation7], 0
    %587 = sst [smem:[%s586]] %s585
    %s588 = scalar_lea.smem [#allocation7], 1
    %589 = sst [smem:[%s588]] %s537
    %s590 = scalar_lea.smem [#allocation7], 2
    %591 = sst [smem:[%s590]] %s549
    // Predicated region
    $region18: #{tpu_custom_call.1} parent=1 // pred_check
      _
    $region19: #{tpu_custom_call.1} parent=1 // pred_check_branch
      %593 = sbr.rel (0) target = $region21
    $region20: #{tpu_custom_call.1} parent=1 // pred_region
      %s595 = ssub.s32 16, 16
      %596 = vsyncadd [#allocation6], %s595
      %599 = dma.smem_to_hbm [#allocation7], 16, %s3, [#allocation6]
    $region21: #{tpu_custom_call.1} parent=1 // pred_fallthru
      _
    // Predicated region
    $region22: #{tpu_custom_call.1} parent=1 // pred_check
      _
    $region23: #{tpu_custom_call.1} parent=1 // pred_check_branch
      %601 = sbr.rel (0) target = $region25
    $region24: #{tpu_custom_call.1} parent=1 // pred_region
      %602 = dma.done [#allocation6], 16
    $region25: #{tpu_custom_call.1} parent=1 // pred_fallthru
      _
    %603 = sfence
    %604 = vsyncpa [#allocation5], 1
    %605 = vsyncpa [#allocation6], 1

</llo_original>
